<compile_context>
chip_gen: v7x
topology: tpu7x:2x2x1
jax: 0.10.0
libtpu: 0.0.40
codegen_flags: <defaults>
</compile_context>

<pallas_src>
import jax
import jax.numpy as jnp
from jax.experimental import pallas as pl
from jax.experimental.pallas import tpu as pltpu

IN_FEATURES = 40
OUT_FEATURES = 30
PAD_OUT = 128          # lane-dense output width (multiple of 128)
DEFAULT_TILE_B = 512   # batch rows per grid step; safe on v5e/v6e/v7x VMEM budgets


def _round_up(x, m):
    return ((x + m - 1) // m) * m


def _nest_mlp_kernel(x_ref, w_ref, b_ref, o_ref):
    # Hot path: MXU matmul + bias add + ReLU on the VPU, all lane-dense on the output side.
    x = x_ref[...]                       # (TILE_B, 40)
    w = w_ref[...]                       # (40, 128)   zero-padded beyond column 30
    b = b_ref[...]                       # (1, 128)    zero-padded beyond column 30
    y = jnp.dot(x, w, preferred_element_type=jnp.float32) + b
    o_ref[...] = jnp.maximum(y, 0.0).astype(o_ref.dtype)


def nest_mlp_forward(x, w, b, *, tile_b=DEFAULT_TILE_B):
    """x: (B, 40) f32, w: (40, 30) f32, b: (30,) f32 -> (B, 30) f32."""
    B = x.shape[0]

    # Pad weight/bias once to a lane-dense 128-wide output (extra columns are zeros,
    # so relu(x @ W_pad + b_pad)[:, :30] == relu(x @ W + b)).
    w_pad = jnp.zeros((IN_FEATURES, PAD_OUT), w.dtype).at[:, :OUT_FEATURES].set(w)
    b_pad = jnp.zeros((1, PAD_OUT), b.dtype).at[0, :OUT_FEATURES].set(b)

    # Choose the batch tile: at least 8 (sublane multiple), at most tile_b, and pad B
    # up to a multiple of the tile so the grid covers it exactly.
    tb = max(8, min(tile_b, _round_up(B, 8)))
    B_pad = _round_up(B, tb)
    x_pad = x if B_pad == B else jnp.pad(x, ((0, B_pad - B), (0, 0)))

    y_pad = pl.pallas_call(
        _nest_mlp_kernel,
        out_shape=jax.ShapeDtypeStruct((B_pad, PAD_OUT), x.dtype),
        grid=(B_pad // tb,),
        in_specs=[
            pl.BlockSpec((tb, IN_FEATURES), lambda i: (i, 0)),        # streamed per tile
            pl.BlockSpec((IN_FEATURES, PAD_OUT), lambda i: (0, 0)),   # resident weight
            pl.BlockSpec((1, PAD_OUT), lambda i: (0, 0)),             # resident bias
        ],
        out_specs=pl.BlockSpec((tb, PAD_OUT), lambda i: (i, 0)),
        compiler_params=pltpu.CompilerParams(
            dimension_semantics=("parallel",),                         # no reduction axis
        ),
    )(x_pad, w_pad, b_pad)

    return y_pad[:B, :OUT_FEATURES]


def init_params(key):
    # Deterministic init mimicking nn.Linear default (uniform in +/- 1/sqrt(fan_in)).
    kw, kb = jax.random.split(key)
    bound = 1.0 / jnp.sqrt(jnp.float32(IN_FEATURES))
    w = jax.random.uniform(
        kw, (IN_FEATURES, OUT_FEATURES), jnp.float32, minval=-bound, maxval=bound
    )
    b = jax.random.uniform(
        kb, (OUT_FEATURES,), jnp.float32, minval=-bound, maxval=bound
    )
    return w, b


if __name__ == "__main__":
    key = jax.random.PRNGKey(0)
    kx, kp = jax.random.split(key)

    B = 8
    x = jax.random.normal(kx, (B, IN_FEATURES), jnp.float32)
    w, b = init_params(kp)

    out = nest_mlp_forward(x, w, b)
    out = jax.block_until_ready(out)

    # Reference check against plain JAX.
    ref = jnp.maximum(x @ w + b[None, :], 0.0)
    assert out.shape == (B, OUT_FEATURES)
    assert jnp.allclose(out, ref, atol=1e-5, rtol=1e-5)

    # Also exercise a batch that is not a multiple of the tile (padding path).
    B2 = 1000
    x2 = jax.random.normal(kx, (B2, IN_FEATURES), jnp.float32)
    out2 = jax.block_until_ready(nest_mlp_forward(x2, w, b))
    ref2 = jnp.maximum(x2 @ w + b[None, :], 0.0)
    assert out2.shape == (B2, OUT_FEATURES)
    assert jnp.allclose(out2, ref2, atol=1e-5, rtol=1e-5)

    print("KERNEL_OK")
</pallas_src>

<mosaic_0001>
module attributes {stable_mosaic.version = 11 : i64} {
  func.func @_nest_mlp_kernel(%arg0: i32, %arg1: memref<8x40xf32, #tpu.memory_space<vmem>>, %arg2: memref<40x128xf32, #tpu.memory_space<vmem>>, %arg3: memref<1x128xf32, #tpu.memory_space<vmem>>, %arg4: memref<8x128xf32, #tpu.memory_space<vmem>>) attributes {dimension_semantics = [#tpu.dimension_semantics<parallel>], iteration_bounds = array<i64: 1>, scalar_prefetch = 0 : i64, scratch_operands = 0 : i64, tpu.core_type = #tpu.core_type<tc>, window_params = [{transform_indices = @transform_0, window_bounds = array<i64: 8, 40>}, {pipeline_mode = #tpu.pipeline_mode<synchronous>, transform_indices = @transform_1, window_bounds = array<i64: 40, 128>}, {pipeline_mode = #tpu.pipeline_mode<synchronous>, transform_indices = @transform_2, window_bounds = array<i64: 1, 128>}, {transform_indices = @transform_3, window_bounds = array<i64: 8, 128>}]} {
    %c0 = arith.constant 0 : index
    %c0_0 = arith.constant 0 : index
    %0 = vector.load %arg1[%c0, %c0_0] : memref<8x40xf32, #tpu.memory_space<vmem>>, vector<8x40xf32>
    %c0_1 = arith.constant 0 : index
    %c0_2 = arith.constant 0 : index
    %1 = vector.load %arg2[%c0_1, %c0_2] : memref<40x128xf32, #tpu.memory_space<vmem>>, vector<40x128xf32>
    %c0_3 = arith.constant 0 : index
    %c0_4 = arith.constant 0 : index
    %2 = vector.load %arg3[%c0_3, %c0_4] : memref<1x128xf32, #tpu.memory_space<vmem>>, vector<1x128xf32>
    %cst = arith.constant dense<0.000000e+00> : vector<8x128xf32>
    %3 = tpu.matmul %0, %1, %cst {dimension_numbers = #tpu.dot_dimension_numbers<[1], [0], [0], [1], [0, 0, 1, 1], [], []>} : vector<8x40xf32>, vector<40x128xf32>, vector<8x128xf32> -> vector<8x128xf32>
    %4 = vector.broadcast %2 : vector<1x128xf32> to vector<8x128xf32>
    %5 = arith.addf %3, %4 : vector<8x128xf32>
    %cst_5 = arith.constant 0.000000e+00 : f32
    %6 = vector.broadcast %cst_5 : f32 to vector<8x128xf32>
    %7 = arith.maximumf %5, %6 : vector<8x128xf32>
    %c0_6 = arith.constant 0 : index
    %c0_7 = arith.constant 0 : index
    %8 = vector.load %arg4[%c0_6, %c0_7] : memref<8x128xf32, #tpu.memory_space<vmem>>, vector<8x128xf32>
    tpu.vector_store %arg4[%c0_6, %c0_7], %7 {strides = array<i32>} : memref<8x128xf32, #tpu.memory_space<vmem>>, vector<8x128xf32>,
    return
  }
  func.func @transform_0(%arg0: i32) -> (i32, i32) {
    %c0_i32 = arith.constant 0 : i32
    %c0_i32_0 = arith.constant 0 : i32
    return %arg0, %c0_i32 : i32, i32
  }
  func.func @transform_1(%arg0: i32) -> (i32, i32) {
    %c0_i32 = arith.constant 0 : i32
    %c0_i32_0 = arith.constant 0 : i32
    %c0_i32_1 = arith.constant 0 : i32
    return %c0_i32, %c0_i32_0 : i32, i32
  }
  func.func @transform_2(%arg0: i32) -> (i32, i32) {
    %c0_i32 = arith.constant 0 : i32
    %c0_i32_0 = arith.constant 0 : i32
    %c0_i32_1 = arith.constant 0 : i32
    return %c0_i32, %c0_i32_0 : i32, i32
  }
  func.func @transform_3(%arg0: i32) -> (i32, i32) {
    %c0_i32 = arith.constant 0 : i32
    %c0_i32_0 = arith.constant 0 : i32
    return %arg0, %c0_i32 : i32, i32
  }
}

</mosaic_0001>

<llo_original>
// kernel: tpu_custom_call.1
$region0: #{tpu_custom_call.1}
  #allocation0 [shape = 'u32[]', space=smem, size = 0x4, offset = 0x4, fixed_abs, tag = 'smem constant byte address 0x4 - core index']
  #allocation1 [shape = 'u32[144,128]{1,0:T(1,128)}', space=vmem, size = 0x12000, scoped, tag = 'internal scratch']
  %s0 = inlined_call_operand.hbm [shape: f32[8,40], index: 0, kind: input, shape index: {}]
  %s1 = inlined_call_operand.hbm [shape: f32[40,128], index: 1, kind: input, shape index: {}]
  %s2 = inlined_call_operand.vmem [shape: f32[1,128], index: 2, kind: input, shape index: {}]
  %s3 = inlined_call_operand.hbm [shape: f32[8,128], index: 3, kind: output, shape index: {}]
  %s4 = sld [smem:[#allocation0]]
  $region30: #{tpu_custom_call.1} parent=0
    _
  %s6 = ssub.s32 1, %s4
  %s7 = scalar_select 0, %s6, %s4
  $region1: #{tpu_custom_call.1} parent=0
    #allocation2 [shape = 'u8[4096]{0}', space=vmem, size = 0x1000, scoped, tag = 'input window, operand 0, single buffered']
    #allocation3 [shape = 's32[1]{0}', space=sflag, size = 0x4, scoped, tag = 'scoped memory for tpu_custom_call.1']
    #allocation4 [shape = 's32[1]{0}', space=sflag, size = 0x4, scoped, tag = 'scoped memory for tpu_custom_call.1']
    #allocation5 [shape = 'u8[20480]{0}', space=vmem, size = 0x5000, scoped, tag = 'input window, operand 1, single buffered']
    #allocation6 [shape = 's32[1]{0}', space=sflag, size = 0x4, scoped, tag = 'scoped memory for tpu_custom_call.1']
    #allocation7 [shape = 'u8[4096]{0}', space=vmem, size = 0x1000, scoped, tag = 'output window, operand 0, single buffered']
    %8 = vsyncpa [#allocation3], 0
    %9 = vsyncpa [#allocation6], 0
    %10 = vsyncpa [#allocation4], 0
    // Predicated region
    $region2: #{tpu_custom_call.1} parent=1 // pred_check
      _
    $region3: #{tpu_custom_call.1} parent=1 // pred_check_branch
      %12 = sbr.rel (0) target = $region5
    $region4: #{tpu_custom_call.1} parent=1 // pred_region
      %s14 = ssub.s32 128, 128
      %15 = vsyncadd [#allocation3], %s14
      %s17 = sshll.u32 [#allocation2], 4
      %s18 = int_to_ptr.vmem [resolvable:$true] %s17
      %20 = dma.hbm_to_vmem [thread:$0]  %s0, 128, %s18, [#allocation3]
    $region5: #{tpu_custom_call.1} parent=1 // pred_fallthru
      _
    // Predicated region
    $region6: #{tpu_custom_call.1} parent=1 // pred_check
      _
    $region7: #{tpu_custom_call.1} parent=1 // pred_check_branch
      %22 = sbr.rel (0) target = $region9
    $region8: #{tpu_custom_call.1} parent=1 // pred_region
      %s24 = ssub.s32 640, 640
      %25 = vsyncadd [#allocation6], %s24
      %s26 = sshll.u32 [#allocation5], 4
      %s27 = int_to_ptr.vmem [resolvable:$true] %s26
      %32 = dma.hbm_to_vmem [thread:$0]  %s1, 640, %s27, [#allocation6], 128, 128, 8
    $region9: #{tpu_custom_call.1} parent=1 // pred_fallthru
      _
    // Predicated region
    $region10: #{tpu_custom_call.1} parent=1 // pred_check
      _
    $region11: #{tpu_custom_call.1} parent=1 // pred_check_branch
      %34 = sbr.rel (0) target = $region13
    $region12: #{tpu_custom_call.1} parent=1 // pred_region
      _
    $region13: #{tpu_custom_call.1} parent=1 // pred_fallthru
      _
    // Predicated region
    $region14: #{tpu_custom_call.1} parent=1 // pred_check
      _
    $region15: #{tpu_custom_call.1} parent=1 // pred_check_branch
      %36 = sbr.rel (0) target = $region17
    $region16: #{tpu_custom_call.1} parent=1 // pred_region
      %37 = dma.done [#allocation3], 128
    $region17: #{tpu_custom_call.1} parent=1 // pred_fallthru
      _
    // Predicated region
    $region18: #{tpu_custom_call.1} parent=1 // pred_check
      _
    $region19: #{tpu_custom_call.1} parent=1 // pred_check_branch
      %39 = sbr.rel (0) target = $region21
    $region20: #{tpu_custom_call.1} parent=1 // pred_region
      %40 = dma.done [#allocation6], 640
    $region21: #{tpu_custom_call.1} parent=1 // pred_fallthru
      _
    %v41 = vld [vmem:[#allocation2] sm:$0xff]
    %v42 = vld [vmem:[#allocation5] sm:$0xff]
    %v43 = vld [vmem:[#allocation5 + $0x8] sm:$0xff]
    %v44 = vld [vmem:[#allocation5 + $0x10] sm:$0xff]
    %v45 = vld [vmem:[#allocation5 + $0x18] sm:$0xff]
    %v46 = vld [vmem:[#allocation5 + $0x20] sm:$0xff]
    %v47 = vld [vmem:[%s2] sm:$0x1]
    %v49 = vlaneseq
    %v50 = vshrl.u32 %v49, 7
    %v51 = vsub.s32 0, %v50
    %v52 = vrot.slane %v47, %v51
    %vm54 = vcmask 326656
    %v56 = vsel %vm54, %v41, 0
    %58 = vmatprep.subr.mxu0 0.0
    %59 = vmatpush1.msra.mxu0 %v42
    %60 = vmatprep.subr.mxu0 0.0
    %61 = vmatpush1.msra.mxu0 %v43
    %62 = vmatprep.subr.mxu0 0.0
    %63 = vmatpush1.msra.mxu0 %v44
    %64 = vmatprep.subr.mxu0 0.0
    %65 = vmatpush1.msra.mxu0 %v45
    %66 = vmatprep.subr.mxu0 0.0
    %67 = vmatpush1.msra.mxu0 %v46
    %68 = vmatprep.subr.mxu0 0.0
    %69 = vmatpush1.msra.mxu0 0.0
    %70 = vmatprep.subr.mxu0 0.0
    %71 = vmatpush1.msra.mxu0 0.0
    %72 = vmatprep.subr.mxu0 0.0
    %73 = vmatpush1.msra.mxu0 0.0
    %74 = vmatprep.subr.mxu0 0.0
    %75 = vmatpush1.msra.mxu0 0.0
    %76 = vmatprep.subr.mxu0 0.0
    %77 = vmatpush1.msra.mxu0 0.0
    %78 = vmatprep.subr.mxu0 0.0
    %79 = vmatpush1.msra.mxu0 0.0
    %80 = vmatprep.subr.mxu0 0.0
    %81 = vmatpush1.msra.mxu0 0.0
    %82 = vmatprep.subr.mxu0 0.0
    %83 = vmatpush1.msra.mxu0 0.0
    %84 = vmatprep.subr.mxu0 0.0
    %85 = vmatpush1.msra.mxu0 0.0
    %86 = vmatprep.subr.mxu0 0.0
    %87 = vmatpush1.msra.mxu0 0.0
    %88 = vmatprep.subr.mxu0 0.0
    %89 = vmatpush1.msra.mxu0 0.0
    %90 = vmatprep.subr.mxu0 0.0
    %91 = vmatpush1.msra.mxu0 0.0
    %92 = vmatprep.subr.mxu0 0.0
    %93 = vmatpush1.msra.mxu0 0.0
    %94 = vmatprep.subr.mxu0 0.0
    %95 = vmatpush1.msra.mxu0 0.0
    %96 = vmatprep.subr.mxu0 0.0
    %97 = vmatpush1.msra.mxu0 0.0
    %98 = vmatprep.subr.mxu0 0.0
    %99 = vmatpush1.msra.mxu0 0.0
    %100 = vmatprep.subr.mxu0 0.0
    %101 = vmatpush1.msra.mxu0 0.0
    %102 = vmatprep.subr.mxu0 0.0
    %103 = vmatpush1.msra.mxu0 0.0
    %104 = vmatprep.subr.mxu0 0.0
    %105 = vmatpush1.msra.mxu0 0.0
    %106 = vmatprep.subr.mxu0 0.0
    %107 = vmatpush1.msra.mxu0 0.0
    %108 = vmatprep.subr.mxu0 0.0
    %109 = vmatpush1.msra.mxu0 0.0
    %110 = vmatprep.subr.mxu0 0.0
    %111 = vmatpush1.msra.mxu0 0.0
    %112 = vmatprep.subr.mxu0 0.0
    %113 = vmatpush1.msra.mxu0 0.0
    %114 = vmatprep.subr.mxu0 0.0
    %115 = vmatpush1.msra.mxu0 0.0
    %116 = vmatprep.subr.mxu0 0.0
    %117 = vmatpush1.msra.mxu0 0.0
    %118 = vmatprep.subr.mxu0 0.0
    %119 = vmatpush1.msra.mxu0 0.0
    %120 = vmatprep.subr.mxu0 0.0
    %121 = vmatpush1.msra.mxu0 0.0
    %122 = vmatprep.mubr.f32.mxu0 0.0
    %123 = vmatmul.mubr.f32.gmra.mrb[0].mxu0 %v56
    %v124 = vpop.f32.mrb[0].mxu0
    %v125 = vadd.f32 %v52, %v124
    %v126 = vpop.f32.mrb[0].mxu0
    %127 = vdwg.mxu0
    %v128 = vmax.f32 %v125, 0.0
    %129 = vst [vmem:[#allocation7] sm:$0xff] %v128
    // Predicated region
    $region22: #{tpu_custom_call.1} parent=1 // pred_check
      _
    $region23: #{tpu_custom_call.1} parent=1 // pred_check_branch
      %131 = sbr.rel (0) target = $region25
    $region24: #{tpu_custom_call.1} parent=1 // pred_region
      %s133 = ssub.s32 128, 128
      %134 = vsyncadd [#allocation4], %s133
      %s136 = sshll.u32 [#allocation7], 4
      %s137 = int_to_ptr.vmem [resolvable:$true] %s136
      %139 = dma.vmem_to_hbm [thread:$0]  %s137, 128, %s3, [#allocation4]
    $region25: #{tpu_custom_call.1} parent=1 // pred_fallthru
      _
    // Predicated region
    $region26: #{tpu_custom_call.1} parent=1 // pred_check
      _
    $region27: #{tpu_custom_call.1} parent=1 // pred_check_branch
      %141 = sbr.rel (0) target = $region29
    $region28: #{tpu_custom_call.1} parent=1 // pred_region
      %142 = dma.done [#allocation4], 128
    $region29: #{tpu_custom_call.1} parent=1 // pred_fallthru
      _
    %143 = vsyncpa [#allocation3], 1
    %144 = vsyncpa [#allocation6], 1
    %145 = vsyncpa [#allocation4], 1

</llo_original>
